<compile_context>
chip_gen: v7x
topology: tpu7x:2x2x1
jax: 0.10.0
libtpu: 0.0.40
codegen_flags: <defaults>
</compile_context>

<pallas_src>
import math

import jax
import jax.numpy as jnp
from jax.experimental import pallas as pl
from jax.experimental.pallas import tpu as pltpu


def _round_up(x, m):
    return ((x + m - 1) // m) * m


# ---------------------------------------------------------------------------
# Kernels
# ---------------------------------------------------------------------------
def _readout_kernel_single(x_ref, w_ref, b_ref, o_ref):
    """grid = (Nv_tiles,): whole-K matmul in one step, bias in the epilogue.
    bf16 operands, f32 MXU accumulation, f32 output."""
    o_ref[...] = (
        jnp.dot(x_ref[...], w_ref[...], preferred_element_type=jnp.float32)
        + b_ref[...]
    )


def _readout_kernel_acc(x_ref, w_ref, b_ref, o_ref):
    """grid = (Nv_tiles, K_tiles): K (program_id(1)) is the reduction axis
    ("arbitrary", last).  The output block index does not depend on k, so
    o_ref is VMEM-resident across K and acts as the f32 accumulator; the bias
    is folded in as the initial accumulator value on the first K step."""
    @pl.when(pl.program_id(1) == 0)
    def _init():
        o_ref[...] = jnp.broadcast_to(b_ref[...], o_ref.shape)

    o_ref[...] += jnp.dot(x_ref[...], w_ref[...],
                          preferred_element_type=jnp.float32)


# ---------------------------------------------------------------------------
# Wrapper: pad / cast operands and launch a single pallas_call
# ---------------------------------------------------------------------------
def fused_readout(x_flat, w_eff, b, *, k_single_max=8192):
    """sigma = x_flat @ w_eff + b  with x_flat (B, K), w_eff (K, Nv), b (Nv,)."""
    B, K = x_flat.shape
    Kw, Nv = w_eff.shape
    assert Kw == K and b.shape == (Nv,)

    # --- tile selection ------------------------------------------------------
    # Lane-dense Nv tiles; prefer >= 2 tiles when Nv allows so the "parallel"
    # Nv axis spans both v7x TensorCores.  Sizes chosen to fit 64 MiB VMEM.
    n_lane = _round_up(Nv, 128)
    tile_n = min(1024, n_lane)
    if n_lane > 128 and n_lane // tile_n < 2:
        tile_n = _round_up((n_lane + 1) // 2, 128)
    N_pad = _round_up(Nv, tile_n)

    k_lane = _round_up(K, 128)
    single_k = k_lane <= k_single_max
    tile_k = k_lane if single_k else 2048
    K_pad = _round_up(K, tile_k)

    B_pad = _round_up(B, 8)  # unmasked f32 output sublane stores

    # --- pad + cast operands (bf16 streams, f32 accumulation) ----------------
    x_p = jnp.pad(x_flat, ((0, B_pad - B), (0, K_pad - K))).astype(jnp.bfloat16)
    w_p = jnp.pad(w_eff.astype(jnp.bfloat16), ((0, K_pad - K), (0, N_pad - Nv)))
    b_p = jnp.pad(b.astype(jnp.float32), ((0, N_pad - Nv),)).reshape(1, N_pad)

    # --- VMEM budget (double-buffered streams), capped for v7x (64 MiB phys) -
    x_bytes = B_pad * tile_k * 2
    w_bytes = tile_k * tile_n * 2
    b_bytes = 8 * tile_n * 4          # (1, tile_n) pads to 8 sublanes
    o_bytes = B_pad * tile_n * 4
    vmem_limit = min(
        48 * 1024 * 1024,
        max(32 * 1024 * 1024,
            2 * (x_bytes + w_bytes + b_bytes + o_bytes) + (2 << 20)),
    )

    if single_k:
        # K axis dropped: X is fully VMEM-resident (fetched once), output
        # written exactly once per Nv tile, bias added in the same step.
        grid_spec = pltpu.PrefetchScalarGridSpec(
            num_scalar_prefetch=0,
            grid=(N_pad // tile_n,),
            in_specs=[
                pl.BlockSpec((B_pad, K_pad), lambda n: (0, 0)),      # X (resident)
                pl.BlockSpec((K_pad, tile_n), lambda n: (0, n)),     # W_eff
                pl.BlockSpec((1, tile_n), lambda n: (0, n)),         # bias
            ],
            out_specs=pl.BlockSpec((B_pad, tile_n), lambda n: (0, n)),
        )
        kernel = _readout_kernel_single
        dims = ("parallel",)
    else:
        grid_spec = pltpu.PrefetchScalarGridSpec(
            num_scalar_prefetch=0,
            grid=(N_pad // tile_n, K_pad // tile_k),
            in_specs=[
                pl.BlockSpec((B_pad, tile_k), lambda n, k: (0, k)),      # X
                pl.BlockSpec((tile_k, tile_n), lambda n, k: (k, n)),     # W_eff
                pl.BlockSpec((1, tile_n), lambda n, k: (0, n)),          # bias
            ],
            out_specs=pl.BlockSpec((B_pad, tile_n), lambda n, k: (0, n)),
        )
        kernel = _readout_kernel_acc
        dims = ("parallel", "arbitrary")   # K is the reduction: keep last / arbitrary

    out = pl.pallas_call(
        kernel,
        out_shape=jax.ShapeDtypeStruct((B_pad, N_pad), jnp.float32),
        grid_spec=grid_spec,
        compiler_params=pltpu.CompilerParams(
            dimension_semantics=dims,
            vmem_limit_bytes=vmem_limit,
        ),
    )(x_p, w_p, b_p)
    return out[:B, :Nv]


# ---------------------------------------------------------------------------
# Parameter preparation (done ONCE per parameter set; hoisted out of forward)
# ---------------------------------------------------------------------------
def prepare_fused_weights(rfs, ws):
    """W_eff[c*HW + p, v] = leaky_relu(rf_i)[p, v] * w_i[c, v], stacked over
    fmaps along K.  Parameter-only work, computed once; stored bf16 so the
    kernel streams half the bytes (accumulation stays f32 in the kernel)."""
    blocks = []
    for rf, w in zip(rfs, ws):
        Hh, Ww, Nv = rf.shape
        C = w.shape[0]
        rf_flat = rf.reshape(Hh * Ww, Nv)
        rf_act = jnp.where(rf_flat >= 0, rf_flat, 0.01 * rf_flat)  # leaky_relu(0.01)
        blocks.append((w[:, None, :] * rf_act[None, :, :]).reshape(C * Hh * Ww, Nv))
    return jnp.concatenate(blocks, axis=0).astype(jnp.bfloat16)


# ---------------------------------------------------------------------------
# Feature-map pyramid stand-in + forward
# ---------------------------------------------------------------------------
def fmaps_fn(x):
    # TODO(synk): `_fmaps_fn` is an external st-yves feature extractor; a plain
    # JAX avg-pool pyramid stands in for it here (glue, not part of the module).
    B, C, H, W = x.shape
    pooled = x.reshape(B, C, H // 2, 2, W // 2, 2).mean(axis=(3, 5))
    return [x, pooled]


def simple_model_forward(x, w_eff, b):
    """Pallas version of simple_model.forward (given precomputed W_eff)."""
    fmaps = fmaps_fn(x)
    B = x.shape[0]
    # NCHW flatten -> row index c*HW + p, matching W_eff ordering.
    x_flat = jnp.concatenate([fm.reshape(B, -1) for fm in fmaps], axis=1)
    return fused_readout(x_flat, w_eff, b)


# ---------------------------------------------------------------------------
# Pure-JAX reference mirroring the PyTorch module (for correctness check)
# ---------------------------------------------------------------------------
def _reference_forward(x, rfs, ws, b):
    fmaps = fmaps_fn(x)
    Nv = b.shape[0]
    sigma = jnp.zeros((Nv,), jnp.float32)
    for fm, rf, w in zip(fmaps, rfs, ws):
        shp = fm.shape
        rf_flat = rf.reshape(-1, Nv)
        rf_act = jnp.where(rf_flat >= 0, rf_flat, 0.01 * rf_flat)
        gamma = jnp.matmul(fm.reshape(shp[0], shp[1], shp[2] * shp[3]), rf_act)
        gamma = gamma * w[None, :, :]
        gamma = gamma.sum(axis=1)
        sigma = sigma + gamma
    return sigma + b


if __name__ == "__main__":
    B, C, H, W = 2, 4, 16, 16      # small NCHW input
    Nv = 128                       # number of voxels (lane-dense)

    key = jax.random.PRNGKey(0)
    kx, kb, k0, k1, k2, k3 = jax.random.split(key, 6)
    x = jax.random.uniform(kx, (B, C, H, W), jnp.float32)

    # Deterministic parameter init mimicking reset_parameters():
    #   kaiming_uniform_(a=sqrt(5)) -> U(-1/sqrt(fan_in), 1/sqrt(fan_in)),
    #   init.uniform_(b) -> U(0, 1)
    fmaps_probe = fmaps_fn(x[:1])
    rf_keys = [k0, k2]
    w_keys = [k1, k3]
    rfs, ws = [], []
    for i, fm in enumerate(fmaps_probe):
        _, ci, hi, wi = fm.shape
        bound_rf = 1.0 / math.sqrt(wi * Nv)   # fan_in of (H, W, Nv) tensor
        bound_w = 1.0 / math.sqrt(Nv)         # fan_in of (C, Nv) tensor
        rfs.append(jax.random.uniform(rf_keys[i], (hi, wi, Nv), jnp.float32,
                                      -bound_rf, bound_rf))
        ws.append(jax.random.uniform(w_keys[i], (ci, Nv), jnp.float32,
                                     -bound_w, bound_w))
    b = jax.random.uniform(kb, (Nv,), jnp.float32)

    # One-time fused-weight prep (parameters are static across forward calls).
    w_eff = prepare_fused_weights(rfs, ws)

    forward = jax.jit(simple_model_forward)
    out = forward(x, w_eff, b)
    out = jax.block_until_ready(out)

    ref = _reference_forward(x, rfs, ws, b)
    assert out.shape == (B, Nv)
    # Tolerance covers bf16 operand rounding (accumulation is f32).
    assert jnp.allclose(out, ref, atol=2e-2, rtol=2e-2), (
        float(jnp.max(jnp.abs(out - ref))))

    print("KERNEL_OK")
</pallas_src>

<mosaic_0001>
module attributes {stable_mosaic.version = 11 : i64} {
  func.func @_readout_kernel_single(%arg0: i32, %arg1: memref<8x1280xbf16, #tpu.memory_space<vmem>>, %arg2: memref<1280x128xbf16, #tpu.memory_space<vmem>>, %arg3: memref<1x128xf32, #tpu.memory_space<vmem>>, %arg4: memref<8x128xf32, #tpu.memory_space<vmem>>) attributes {dimension_semantics = [#tpu.dimension_semantics<parallel>], iteration_bounds = array<i64: 1>, scalar_prefetch = 0 : i64, scratch_operands = 0 : i64, tpu.core_type = #tpu.core_type<tc>, window_params = [{pipeline_mode = #tpu.pipeline_mode<synchronous>, transform_indices = @transform_0, window_bounds = array<i64: 8, 1280>}, {transform_indices = @transform_1, window_bounds = array<i64: 1280, 128>}, {transform_indices = @transform_2, window_bounds = array<i64: 1, 128>}, {transform_indices = @transform_3, window_bounds = array<i64: 8, 128>}]} {
    %c0 = arith.constant 0 : index
    %c0_0 = arith.constant 0 : index
    %0 = vector.load %arg1[%c0, %c0_0] : memref<8x1280xbf16, #tpu.memory_space<vmem>>, vector<8x1280xbf16>
    %c0_1 = arith.constant 0 : index
    %c0_2 = arith.constant 0 : index
    %1 = vector.load %arg2[%c0_1, %c0_2] : memref<1280x128xbf16, #tpu.memory_space<vmem>>, vector<1280x128xbf16>
    %cst = arith.constant dense<0.000000e+00> : vector<8x128xf32>
    %2 = tpu.matmul %0, %1, %cst {dimension_numbers = #tpu.dot_dimension_numbers<[1], [0], [0], [1], [0, 0, 1, 1], [], []>} : vector<8x1280xbf16>, vector<1280x128xbf16>, vector<8x128xf32> -> vector<8x128xf32>
    %c0_3 = arith.constant 0 : index
    %c0_4 = arith.constant 0 : index
    %3 = vector.load %arg3[%c0_3, %c0_4] : memref<1x128xf32, #tpu.memory_space<vmem>>, vector<1x128xf32>
    %4 = vector.broadcast %3 : vector<1x128xf32> to vector<8x128xf32>
    %5 = arith.addf %2, %4 : vector<8x128xf32>
    %c0_5 = arith.constant 0 : index
    %c0_6 = arith.constant 0 : index
    %6 = vector.load %arg4[%c0_5, %c0_6] : memref<8x128xf32, #tpu.memory_space<vmem>>, vector<8x128xf32>
    tpu.vector_store %arg4[%c0_5, %c0_6], %5 {strides = array<i32>} : memref<8x128xf32, #tpu.memory_space<vmem>>, vector<8x128xf32>,
    return
  }
  func.func @transform_0(%arg0: i32) -> (i32, i32) {
    %c0_i32 = arith.constant 0 : i32
    %c0_i32_0 = arith.constant 0 : i32
    %c0_i32_1 = arith.constant 0 : i32
    return %c0_i32, %c0_i32_0 : i32, i32
  }
  func.func @transform_1(%arg0: i32) -> (i32, i32) {
    %c0_i32 = arith.constant 0 : i32
    %c0_i32_0 = arith.constant 0 : i32
    return %c0_i32, %arg0 : i32, i32
  }
  func.func @transform_2(%arg0: i32) -> (i32, i32) {
    %c0_i32 = arith.constant 0 : i32
    %c0_i32_0 = arith.constant 0 : i32
    return %c0_i32, %arg0 : i32, i32
  }
  func.func @transform_3(%arg0: i32) -> (i32, i32) {
    %c0_i32 = arith.constant 0 : i32
    %c0_i32_0 = arith.constant 0 : i32
    return %c0_i32, %arg0 : i32, i32
  }
}

</mosaic_0001>

<llo_original>
// kernel: simple_model_forward.1
$region0: #{simple_model_forward.1}
  #allocation0 [shape = 'u32[]', space=smem, size = 0x4, offset = 0x4, fixed_abs, tag = 'smem constant byte address 0x4 - core index']
  #allocation1 [shape = 'u32[144,128]{1,0:T(1,128)}', space=vmem, size = 0x12000, scoped, tag = 'internal scratch']
  %s0 = inlined_call_operand.vmem [shape: bf16[8,1280], index: 0, kind: input, shape index: {}]
  %s1 = inlined_call_operand.vmem [shape: bf16[1280,128], index: 1, kind: input, shape index: {}]
  %s2 = inlined_call_operand.vmem [shape: f32[1,128], index: 2, kind: input, shape index: {}]
  %s3 = inlined_call_operand.vmem [shape: f32[8,128], index: 3, kind: output, shape index: {}]
  %s4 = sld [smem:[#allocation0]]
  $region22: #{simple_model_forward.1} parent=0
    _
  %s6 = ssub.s32 1, %s4
  %s7 = scalar_select 0, %s6, %s4
  // Predicated region
  $region2: #{simple_model_forward.1} parent=0 // pred_check
    _
  $region3: #{simple_model_forward.1} parent=0 // pred_check_branch
    %9 = sbr.rel (0) target = $region5
  $region4: #{simple_model_forward.1} parent=0 // pred_region
    _
  $region5: #{simple_model_forward.1} parent=0 // pred_fallthru
    _
  // Predicated region
  $region6: #{simple_model_forward.1} parent=0 // pred_check
    _
  $region7: #{simple_model_forward.1} parent=0 // pred_check_branch
    %11 = sbr.rel (0) target = $region9
  $region8: #{simple_model_forward.1} parent=0 // pred_region
    _
  $region9: #{simple_model_forward.1} parent=0 // pred_fallthru
    _
  // Predicated region
  $region10: #{simple_model_forward.1} parent=0 // pred_check
    _
  $region11: #{simple_model_forward.1} parent=0 // pred_check_branch
    %13 = sbr.rel (0) target = $region13
  $region12: #{simple_model_forward.1} parent=0 // pred_region
    _
  $region13: #{simple_model_forward.1} parent=0 // pred_fallthru
    _
  %v15 = vld [vmem:[%s0] sm:$0xff]
  %v16 = vld [vmem:[%s0 + $0x8] sm:$0xff]
  %v17 = vld [vmem:[%s0 + $0x10] sm:$0xff]
  %v18 = vld [vmem:[%s0 + $0x18] sm:$0xff]
  %v19 = vld [vmem:[%s0 + $0x20] sm:$0xff]
  %v20 = vld [vmem:[%s1] sm:$0xf]
  %v21 = vld [vmem:[%s1 + $0x4] sm:$0xf]
  %v22 = vld [vmem:[%s1 + $0x8] sm:$0xf]
  %v23 = vld [vmem:[%s1 + $0xc] sm:$0xf]
  %v24 = vld [vmem:[%s1 + $0x10] sm:$0xf]
  %v25 = vld [vmem:[%s1 + $0x14] sm:$0xf]
  %v26 = vld [vmem:[%s1 + $0x18] sm:$0xf]
  %v27 = vld [vmem:[%s1 + $0x1c] sm:$0xf]
  %v28 = vld [vmem:[%s1 + $0x20] sm:$0xf]
  %v29 = vld [vmem:[%s1 + $0x24] sm:$0xf]
  %v30 = vld [vmem:[%s1 + $0x28] sm:$0xf]
  %v31 = vld [vmem:[%s1 + $0x2c] sm:$0xf]
  %v32 = vld [vmem:[%s1 + $0x30] sm:$0xf]
  %v33 = vld [vmem:[%s1 + $0x34] sm:$0xf]
  %v34 = vld [vmem:[%s1 + $0x38] sm:$0xf]
  %v35 = vld [vmem:[%s1 + $0x3c] sm:$0xf]
  %v36 = vld [vmem:[%s1 + $0x40] sm:$0xf]
  %v37 = vld [vmem:[%s1 + $0x44] sm:$0xf]
  %v38 = vld [vmem:[%s1 + $0x48] sm:$0xf]
  %v39 = vld [vmem:[%s1 + $0x4c] sm:$0xf]
  %v40 = vld [vmem:[%s1 + $0x50] sm:$0xf]
  %v41 = vld [vmem:[%s1 + $0x54] sm:$0xf]
  %v42 = vld [vmem:[%s1 + $0x58] sm:$0xf]
  %v43 = vld [vmem:[%s1 + $0x5c] sm:$0xf]
  %v44 = vld [vmem:[%s1 + $0x60] sm:$0xf]
  %v45 = vld [vmem:[%s1 + $0x64] sm:$0xf]
  %v46 = vld [vmem:[%s1 + $0x68] sm:$0xf]
  %v47 = vld [vmem:[%s1 + $0x6c] sm:$0xf]
  %v48 = vld [vmem:[%s1 + $0x70] sm:$0xf]
  %v49 = vld [vmem:[%s1 + $0x74] sm:$0xf]
  %v50 = vld [vmem:[%s1 + $0x78] sm:$0xf]
  %v51 = vld [vmem:[%s1 + $0x7c] sm:$0xf]
  %v52 = vld [vmem:[%s1 + $0x80] sm:$0xf]
  %v53 = vld [vmem:[%s1 + $0x84] sm:$0xf]
  %v54 = vld [vmem:[%s1 + $0x88] sm:$0xf]
  %v55 = vld [vmem:[%s1 + $0x8c] sm:$0xf]
  %v56 = vld [vmem:[%s1 + $0x90] sm:$0xf]
  %v57 = vld [vmem:[%s1 + $0x94] sm:$0xf]
  %v58 = vld [vmem:[%s1 + $0x98] sm:$0xf]
  %v59 = vld [vmem:[%s1 + $0x9c] sm:$0xf]
  %v60 = vld [vmem:[%s1 + $0xa0] sm:$0xf]
  %v61 = vld [vmem:[%s1 + $0xa4] sm:$0xf]
  %v62 = vld [vmem:[%s1 + $0xa8] sm:$0xf]
  %v63 = vld [vmem:[%s1 + $0xac] sm:$0xf]
  %v64 = vld [vmem:[%s1 + $0xb0] sm:$0xf]
  %v65 = vld [vmem:[%s1 + $0xb4] sm:$0xf]
  %v66 = vld [vmem:[%s1 + $0xb8] sm:$0xf]
  %v67 = vld [vmem:[%s1 + $0xbc] sm:$0xf]
  %v68 = vld [vmem:[%s1 + $0xc0] sm:$0xf]
  %v69 = vld [vmem:[%s1 + $0xc4] sm:$0xf]
  %v70 = vld [vmem:[%s1 + $0xc8] sm:$0xf]
  %v71 = vld [vmem:[%s1 + $0xcc] sm:$0xf]
  %v72 = vld [vmem:[%s1 + $0xd0] sm:$0xf]
  %v73 = vld [vmem:[%s1 + $0xd4] sm:$0xf]
  %v74 = vld [vmem:[%s1 + $0xd8] sm:$0xf]
  %v75 = vld [vmem:[%s1 + $0xdc] sm:$0xf]
  %v76 = vld [vmem:[%s1 + $0xe0] sm:$0xf]
  %v77 = vld [vmem:[%s1 + $0xe4] sm:$0xf]
  %v78 = vld [vmem:[%s1 + $0xe8] sm:$0xf]
  %v79 = vld [vmem:[%s1 + $0xec] sm:$0xf]
  %v80 = vld [vmem:[%s1 + $0xf0] sm:$0xf]
  %v81 = vld [vmem:[%s1 + $0xf4] sm:$0xf]
  %v82 = vld [vmem:[%s1 + $0xf8] sm:$0xf]
  %v83 = vld [vmem:[%s1 + $0xfc] sm:$0xf]
  %v84 = vld [vmem:[%s1 + $0x100] sm:$0xf]
  %v85 = vld [vmem:[%s1 + $0x104] sm:$0xf]
  %v86 = vld [vmem:[%s1 + $0x108] sm:$0xf]
  %v87 = vld [vmem:[%s1 + $0x10c] sm:$0xf]
  %v88 = vld [vmem:[%s1 + $0x110] sm:$0xf]
  %v89 = vld [vmem:[%s1 + $0x114] sm:$0xf]
  %v90 = vld [vmem:[%s1 + $0x118] sm:$0xf]
  %v91 = vld [vmem:[%s1 + $0x11c] sm:$0xf]
  %v92 = vld [vmem:[%s1 + $0x120] sm:$0xf]
  %v93 = vld [vmem:[%s1 + $0x124] sm:$0xf]
  %v94 = vld [vmem:[%s1 + $0x128] sm:$0xf]
  %v95 = vld [vmem:[%s1 + $0x12c] sm:$0xf]
  %v96 = vld [vmem:[%s1 + $0x130] sm:$0xf]
  %v97 = vld [vmem:[%s1 + $0x134] sm:$0xf]
  %v98 = vld [vmem:[%s1 + $0x138] sm:$0xf]
  %v99 = vld [vmem:[%s1 + $0x13c] sm:$0xf]
  %v100 = vld [vmem:[%s1 + $0x140] sm:$0xf]
  %v101 = vld [vmem:[%s1 + $0x144] sm:$0xf]
  %v102 = vld [vmem:[%s1 + $0x148] sm:$0xf]
  %v103 = vld [vmem:[%s1 + $0x14c] sm:$0xf]
  %v104 = vld [vmem:[%s1 + $0x150] sm:$0xf]
  %v105 = vld [vmem:[%s1 + $0x154] sm:$0xf]
  %v106 = vld [vmem:[%s1 + $0x158] sm:$0xf]
  %v107 = vld [vmem:[%s1 + $0x15c] sm:$0xf]
  %v108 = vld [vmem:[%s1 + $0x160] sm:$0xf]
  %v109 = vld [vmem:[%s1 + $0x164] sm:$0xf]
  %v110 = vld [vmem:[%s1 + $0x168] sm:$0xf]
  %v111 = vld [vmem:[%s1 + $0x16c] sm:$0xf]
  %v112 = vld [vmem:[%s1 + $0x170] sm:$0xf]
  %v113 = vld [vmem:[%s1 + $0x174] sm:$0xf]
  %v114 = vld [vmem:[%s1 + $0x178] sm:$0xf]
  %v115 = vld [vmem:[%s1 + $0x17c] sm:$0xf]
  %v116 = vld [vmem:[%s1 + $0x180] sm:$0xf]
  %v117 = vld [vmem:[%s1 + $0x184] sm:$0xf]
  %v118 = vld [vmem:[%s1 + $0x188] sm:$0xf]
  %v119 = vld [vmem:[%s1 + $0x18c] sm:$0xf]
  %v120 = vld [vmem:[%s1 + $0x190] sm:$0xf]
  %v121 = vld [vmem:[%s1 + $0x194] sm:$0xf]
  %v122 = vld [vmem:[%s1 + $0x198] sm:$0xf]
  %v123 = vld [vmem:[%s1 + $0x19c] sm:$0xf]
  %v124 = vld [vmem:[%s1 + $0x1a0] sm:$0xf]
  %v125 = vld [vmem:[%s1 + $0x1a4] sm:$0xf]
  %v126 = vld [vmem:[%s1 + $0x1a8] sm:$0xf]
  %v127 = vld [vmem:[%s1 + $0x1ac] sm:$0xf]
  %v128 = vld [vmem:[%s1 + $0x1b0] sm:$0xf]
  %v129 = vld [vmem:[%s1 + $0x1b4] sm:$0xf]
  %v130 = vld [vmem:[%s1 + $0x1b8] sm:$0xf]
  %v131 = vld [vmem:[%s1 + $0x1bc] sm:$0xf]
  %v132 = vld [vmem:[%s1 + $0x1c0] sm:$0xf]
  %v133 = vld [vmem:[%s1 + $0x1c4] sm:$0xf]
  %v134 = vld [vmem:[%s1 + $0x1c8] sm:$0xf]
  %v135 = vld [vmem:[%s1 + $0x1cc] sm:$0xf]
  %v136 = vld [vmem:[%s1 + $0x1d0] sm:$0xf]
  %v137 = vld [vmem:[%s1 + $0x1d4] sm:$0xf]
  %v138 = vld [vmem:[%s1 + $0x1d8] sm:$0xf]
  %v139 = vld [vmem:[%s1 + $0x1dc] sm:$0xf]
  %v140 = vld [vmem:[%s1 + $0x1e0] sm:$0xf]
  %v141 = vld [vmem:[%s1 + $0x1e4] sm:$0xf]
  %v142 = vld [vmem:[%s1 + $0x1e8] sm:$0xf]
  %v143 = vld [vmem:[%s1 + $0x1ec] sm:$0xf]
  %v144 = vld [vmem:[%s1 + $0x1f0] sm:$0xf]
  %v145 = vld [vmem:[%s1 + $0x1f4] sm:$0xf]
  %v146 = vld [vmem:[%s1 + $0x1f8] sm:$0xf]
  %v147 = vld [vmem:[%s1 + $0x1fc] sm:$0xf]
  %v148 = vld [vmem:[%s1 + $0x200] sm:$0xf]
  %v149 = vld [vmem:[%s1 + $0x204] sm:$0xf]
  %v150 = vld [vmem:[%s1 + $0x208] sm:$0xf]
  %v151 = vld [vmem:[%s1 + $0x20c] sm:$0xf]
  %v152 = vld [vmem:[%s1 + $0x210] sm:$0xf]
  %v153 = vld [vmem:[%s1 + $0x214] sm:$0xf]
  %v154 = vld [vmem:[%s1 + $0x218] sm:$0xf]
  %v155 = vld [vmem:[%s1 + $0x21c] sm:$0xf]
  %v156 = vld [vmem:[%s1 + $0x220] sm:$0xf]
  %v157 = vld [vmem:[%s1 + $0x224] sm:$0xf]
  %v158 = vld [vmem:[%s1 + $0x228] sm:$0xf]
  %v159 = vld [vmem:[%s1 + $0x22c] sm:$0xf]
  %v160 = vld [vmem:[%s1 + $0x230] sm:$0xf]
  %v161 = vld [vmem:[%s1 + $0x234] sm:$0xf]
  %v162 = vld [vmem:[%s1 + $0x238] sm:$0xf]
  %v163 = vld [vmem:[%s1 + $0x23c] sm:$0xf]
  %v164 = vld [vmem:[%s1 + $0x240] sm:$0xf]
  %v165 = vld [vmem:[%s1 + $0x244] sm:$0xf]
  %v166 = vld [vmem:[%s1 + $0x248] sm:$0xf]
  %v167 = vld [vmem:[%s1 + $0x24c] sm:$0xf]
  %v168 = vld [vmem:[%s1 + $0x250] sm:$0xf]
  %v169 = vld [vmem:[%s1 + $0x254] sm:$0xf]
  %v170 = vld [vmem:[%s1 + $0x258] sm:$0xf]
  %v171 = vld [vmem:[%s1 + $0x25c] sm:$0xf]
  %v172 = vld [vmem:[%s1 + $0x260] sm:$0xf]
  %v173 = vld [vmem:[%s1 + $0x264] sm:$0xf]
  %v174 = vld [vmem:[%s1 + $0x268] sm:$0xf]
  %v175 = vld [vmem:[%s1 + $0x26c] sm:$0xf]
  %v176 = vld [vmem:[%s1 + $0x270] sm:$0xf]
  %v177 = vld [vmem:[%s1 + $0x274] sm:$0xf]
  %v178 = vld [vmem:[%s1 + $0x278] sm:$0xf]
  %v179 = vld [vmem:[%s1 + $0x27c] sm:$0xf]
  %v180 = vld [vmem:[%s2] sm:$0x1]
  %v182 = vlaneseq
  %v183 = vshrl.u32 %v182, 7
  %v184 = vsub.s32 0, %v183
  %v185 = vrot.slane %v180, %v184
  %v192 = vunpack.c.l.b16 %v15
  %v193 = vunpack.c.h.b16 %v15
  %v194 = vunpack.c.l.b16 %v16
  %v195 = vunpack.c.h.b16 %v16
  %v196 = vunpack.c.l.b16 %v17
  %v197 = vunpack.c.h.b16 %v17
  %v198 = vunpack.c.l.b16 %v18
  %v199 = vunpack.c.h.b16 %v18
  %v200 = vunpack.c.l.b16 %v19
  %v201 = vunpack.c.h.b16 %v19
  %v202 = vpack.c.b16 %v192, %v192
  %v203 = vpack.c.b16 %v193, %v193
  %v204 = vpack.c.b16 %v194, %v194
  %v205 = vpack.c.b16 %v195, %v195
  %v206 = vpack.c.b16 %v196, %v196
  %v207 = vpack.c.b16 %v197, %v197
  %v208 = vpack.c.b16 %v198, %v198
  %v209 = vpack.c.b16 %v199, %v199
  %v210 = vpack.c.b16 %v200, %v200
  %v211 = vpack.c.b16 %v201, %v201
  %v382 = vunpack.c.l.b16 %v20
  %v383 = vunpack.c.l.b16 %v21
  %v384 = vunpack.c.l.b16 %v22
  %v385 = vunpack.c.l.b16 %v23
  %v386 = vunpack.c.l.b16 %v24
  %v387 = vunpack.c.l.b16 %v25
  %v388 = vunpack.c.l.b16 %v26
  %v389 = vunpack.c.l.b16 %v27
  %v390 = vunpack.c.l.b16 %v28
  %v391 = vunpack.c.l.b16 %v29
  %v392 = vunpack.c.l.b16 %v30
  %v393 = vunpack.c.l.b16 %v31
  %v394 = vunpack.c.l.b16 %v32
  %v395 = vunpack.c.l.b16 %v33
  %v396 = vunpack.c.l.b16 %v34
  %v397 = vunpack.c.l.b16 %v35
  %v398 = vunpack.c.l.b16 %v36
  %v399 = vunpack.c.l.b16 %v37
  %v400 = vunpack.c.l.b16 %v38
  %v401 = vunpack.c.l.b16 %v39
  %v402 = vunpack.c.l.b16 %v40
  %v403 = vunpack.c.l.b16 %v41
  %v404 = vunpack.c.l.b16 %v42
  %v405 = vunpack.c.l.b16 %v43
  %v406 = vunpack.c.l.b16 %v44
  %v407 = vunpack.c.l.b16 %v45
  %v408 = vunpack.c.l.b16 %v46
  %v409 = vunpack.c.l.b16 %v47
  %v410 = vunpack.c.l.b16 %v48
  %v411 = vunpack.c.l.b16 %v49
  %v412 = vunpack.c.l.b16 %v50
  %v413 = vunpack.c.l.b16 %v51
  %v414 = vunpack.c.l.b16 %v52
  %v415 = vunpack.c.l.b16 %v53
  %v416 = vunpack.c.l.b16 %v54
  %v417 = vunpack.c.l.b16 %v55
  %v418 = vunpack.c.l.b16 %v56
  %v419 = vunpack.c.l.b16 %v57
  %v420 = vunpack.c.l.b16 %v58
  %v421 = vunpack.c.l.b16 %v59
  %v422 = vunpack.c.l.b16 %v60
  %v423 = vunpack.c.l.b16 %v61
  %v424 = vunpack.c.l.b16 %v62
  %v425 = vunpack.c.l.b16 %v63
  %v426 = vunpack.c.l.b16 %v64
  %v427 = vunpack.c.l.b16 %v65
  %v428 = vunpack.c.l.b16 %v66
  %v429 = vunpack.c.l.b16 %v67
  %v430 = vunpack.c.l.b16 %v68
  %v431 = vunpack.c.l.b16 %v69
  %v432 = vunpack.c.l.b16 %v70
  %v433 = vunpack.c.l.b16 %v71
  %v434 = vunpack.c.l.b16 %v72
  %v435 = vunpack.c.l.b16 %v73
  %v436 = vunpack.c.l.b16 %v74
  %v437 = vunpack.c.l.b16 %v75
  %v438 = vunpack.c.l.b16 %v76
  %v439 = vunpack.c.l.b16 %v77
  %v440 = vunpack.c.l.b16 %v78
  %v441 = vunpack.c.l.b16 %v79
  %v442 = vunpack.c.l.b16 %v80
  %v443 = vunpack.c.l.b16 %v81
  %v444 = vunpack.c.l.b16 %v82
  %v445 = vunpack.c.l.b16 %v83
  %v446 = vunpack.c.l.b16 %v84
  %v447 = vunpack.c.l.b16 %v85
  %v448 = vunpack.c.l.b16 %v86
  %v449 = vunpack.c.l.b16 %v87
  %v450 = vunpack.c.l.b16 %v88
  %v451 = vunpack.c.l.b16 %v89
  %v452 = vunpack.c.l.b16 %v90
  %v453 = vunpack.c.l.b16 %v91
  %v454 = vunpack.c.l.b16 %v92
  %v455 = vunpack.c.l.b16 %v93
  %v456 = vunpack.c.l.b16 %v94
  %v457 = vunpack.c.l.b16 %v95
  %v458 = vunpack.c.l.b16 %v96
  %v459 = vunpack.c.l.b16 %v97
  %v460 = vunpack.c.l.b16 %v98
  %v461 = vunpack.c.l.b16 %v99
  %v462 = vunpack.c.l.b16 %v100
  %v463 = vunpack.c.l.b16 %v101
  %v464 = vunpack.c.l.b16 %v102
  %v465 = vunpack.c.l.b16 %v103
  %v466 = vunpack.c.l.b16 %v104
  %v467 = vunpack.c.l.b16 %v105
  %v468 = vunpack.c.l.b16 %v106
  %v469 = vunpack.c.l.b16 %v107
  %v470 = vunpack.c.l.b16 %v108
  %v471 = vunpack.c.l.b16 %v109
  %v472 = vunpack.c.l.b16 %v110
  %v473 = vunpack.c.l.b16 %v111
  %v474 = vunpack.c.l.b16 %v112
  %v475 = vunpack.c.l.b16 %v113
  %v476 = vunpack.c.l.b16 %v114
  %v477 = vunpack.c.l.b16 %v115
  %v478 = vunpack.c.l.b16 %v116
  %v479 = vunpack.c.l.b16 %v117
  %v480 = vunpack.c.l.b16 %v118
  %v481 = vunpack.c.l.b16 %v119
  %v482 = vunpack.c.l.b16 %v120
  %v483 = vunpack.c.l.b16 %v121
  %v484 = vunpack.c.l.b16 %v122
  %v485 = vunpack.c.l.b16 %v123
  %v486 = vunpack.c.l.b16 %v124
  %v487 = vunpack.c.l.b16 %v125
  %v488 = vunpack.c.l.b16 %v126
  %v489 = vunpack.c.l.b16 %v127
  %v490 = vunpack.c.l.b16 %v128
  %v491 = vunpack.c.l.b16 %v129
  %v492 = vunpack.c.l.b16 %v130
  %v493 = vunpack.c.l.b16 %v131
  %v494 = vunpack.c.l.b16 %v132
  %v495 = vunpack.c.l.b16 %v133
  %v496 = vunpack.c.l.b16 %v134
  %v497 = vunpack.c.l.b16 %v135
  %v498 = vunpack.c.l.b16 %v136
  %v499 = vunpack.c.l.b16 %v137
  %v500 = vunpack.c.l.b16 %v138
  %v501 = vunpack.c.l.b16 %v139
  %v502 = vunpack.c.l.b16 %v140
  %v503 = vunpack.c.l.b16 %v141
  %v504 = vunpack.c.l.b16 %v142
  %v505 = vunpack.c.l.b16 %v143
  %v506 = vunpack.c.l.b16 %v144
  %v507 = vunpack.c.l.b16 %v145
  %v508 = vunpack.c.l.b16 %v146
  %v509 = vunpack.c.l.b16 %v147
  %v510 = vunpack.c.l.b16 %v148
  %v511 = vunpack.c.l.b16 %v149
  %v512 = vunpack.c.l.b16 %v150
  %v513 = vunpack.c.l.b16 %v151
  %v514 = vunpack.c.l.b16 %v152
  %v515 = vunpack.c.l.b16 %v153
  %v516 = vunpack.c.l.b16 %v154
  %v517 = vunpack.c.l.b16 %v155
  %v518 = vunpack.c.l.b16 %v156
  %v519 = vunpack.c.l.b16 %v157
  %v520 = vunpack.c.l.b16 %v158
  %v521 = vunpack.c.l.b16 %v159
  %v522 = vunpack.c.l.b16 %v160
  %v523 = vunpack.c.l.b16 %v161
  %v524 = vunpack.c.l.b16 %v162
  %v525 = vunpack.c.l.b16 %v163
  %v526 = vunpack.c.l.b16 %v164
  %v527 = vunpack.c.l.b16 %v165
  %v528 = vunpack.c.l.b16 %v166
  %v529 = vunpack.c.l.b16 %v167
  %v530 = vunpack.c.l.b16 %v168
  %v531 = vunpack.c.l.b16 %v169
  %v532 = vunpack.c.l.b16 %v170
  %v533 = vunpack.c.l.b16 %v171
  %v534 = vunpack.c.l.b16 %v172
  %v535 = vunpack.c.l.b16 %v173
  %v536 = vunpack.c.l.b16 %v174
  %v537 = vunpack.c.l.b16 %v175
  %v538 = vunpack.c.l.b16 %v176
  %v539 = vunpack.c.l.b16 %v177
  %v540 = vunpack.c.l.b16 %v178
  %v541 = vunpack.c.l.b16 %v179
  %v542 = vpack.c.b16 %v383, %v382
  %v543 = vpack.c.b16 %v385, %v384
  %v544 = vpack.c.b16 %v387, %v386
  %v545 = vpack.c.b16 %v389, %v388
  %v546 = vpack.c.b16 %v391, %v390
  %v547 = vpack.c.b16 %v393, %v392
  %v548 = vpack.c.b16 %v395, %v394
  %v549 = vpack.c.b16 %v397, %v396
  %v550 = vpack.c.b16 %v399, %v398
  %v551 = vpack.c.b16 %v401, %v400
  %v552 = vpack.c.b16 %v403, %v402
  %v553 = vpack.c.b16 %v405, %v404
  %v554 = vpack.c.b16 %v407, %v406
  %v555 = vpack.c.b16 %v409, %v408
  %v556 = vpack.c.b16 %v411, %v410
  %v557 = vpack.c.b16 %v413, %v412
  %v558 = vpack.c.b16 %v415, %v414
  %v559 = vpack.c.b16 %v417, %v416
  %v560 = vpack.c.b16 %v419, %v418
  %v561 = vpack.c.b16 %v421, %v420
  %v562 = vpack.c.b16 %v423, %v422
  %v563 = vpack.c.b16 %v425, %v424
  %v564 = vpack.c.b16 %v427, %v426
  %v565 = vpack.c.b16 %v429, %v428
  %v566 = vpack.c.b16 %v431, %v430
  %v567 = vpack.c.b16 %v433, %v432
  %v568 = vpack.c.b16 %v435, %v434
  %v569 = vpack.c.b16 %v437, %v436
  %v570 = vpack.c.b16 %v439, %v438
  %v571 = vpack.c.b16 %v441, %v440
  %v572 = vpack.c.b16 %v443, %v442
  %v573 = vpack.c.b16 %v445, %v444
  %v574 = vpack.c.b16 %v447, %v446
  %v575 = vpack.c.b16 %v449, %v448
  %v576 = vpack.c.b16 %v451, %v450
  %v577 = vpack.c.b16 %v453, %v452
  %v578 = vpack.c.b16 %v455, %v454
  %v579 = vpack.c.b16 %v457, %v456
  %v580 = vpack.c.b16 %v459, %v458
  %v581 = vpack.c.b16 %v461, %v460
  %v582 = vpack.c.b16 %v463, %v462
  %v583 = vpack.c.b16 %v465, %v464
  %v584 = vpack.c.b16 %v467, %v466
  %v585 = vpack.c.b16 %v469, %v468
  %v586 = vpack.c.b16 %v471, %v470
  %v587 = vpack.c.b16 %v473, %v472
  %v588 = vpack.c.b16 %v475, %v474
  %v589 = vpack.c.b16 %v477, %v476
  %v590 = vpack.c.b16 %v479, %v478
  %v591 = vpack.c.b16 %v481, %v480
  %v592 = vpack.c.b16 %v483, %v482
  %v593 = vpack.c.b16 %v485, %v484
  %v594 = vpack.c.b16 %v487, %v486
  %v595 = vpack.c.b16 %v489, %v488
  %v596 = vpack.c.b16 %v491, %v490
  %v597 = vpack.c.b16 %v493, %v492
  %v598 = vpack.c.b16 %v495, %v494
  %v599 = vpack.c.b16 %v497, %v496
  %v600 = vpack.c.b16 %v499, %v498
  %v601 = vpack.c.b16 %v501, %v500
  %v602 = vpack.c.b16 %v503, %v502
  %v603 = vpack.c.b16 %v505, %v504
  %v604 = vpack.c.b16 %v507, %v506
  %v605 = vpack.c.b16 %v509, %v508
  %v606 = vpack.c.b16 %v511, %v510
  %v607 = vpack.c.b16 %v513, %v512
  %v608 = vpack.c.b16 %v515, %v514
  %v609 = vpack.c.b16 %v517, %v516
  %v610 = vpack.c.b16 %v519, %v518
  %v611 = vpack.c.b16 %v521, %v520
  %v612 = vpack.c.b16 %v523, %v522
  %v613 = vpack.c.b16 %v525, %v524
  %v614 = vpack.c.b16 %v527, %v526
  %v615 = vpack.c.b16 %v529, %v528
  %v616 = vpack.c.b16 %v531, %v530
  %v617 = vpack.c.b16 %v533, %v532
  %v618 = vpack.c.b16 %v535, %v534
  %v619 = vpack.c.b16 %v537, %v536
  %v620 = vpack.c.b16 %v539, %v538
  %v621 = vpack.c.b16 %v541, %v540
  %702 = vmatprep.subr.bf16.mxu0 0
  %703 = vmatpush1.bf16.msra.mxu0 %v542
  %704 = vmatprep.subr.bf16.mxu0 0
  %705 = vmatpush1.bf16.msra.mxu0 %v543
  %706 = vmatprep.subr.bf16.mxu0 0
  %707 = vmatpush1.bf16.msra.mxu0 %v544
  %708 = vmatprep.subr.bf16.mxu0 0
  %709 = vmatpush1.bf16.msra.mxu0 %v545
  %710 = vmatprep.subr.bf16.mxu0 0
  %711 = vmatpush1.bf16.msra.mxu0 %v546
  %712 = vmatprep.subr.bf16.mxu0 0
  %713 = vmatpush1.bf16.msra.mxu0 %v547
  %714 = vmatprep.subr.bf16.mxu0 0
  %715 = vmatpush1.bf16.msra.mxu0 %v548
  %716 = vmatprep.subr.bf16.mxu0 0
  %717 = vmatpush1.bf16.msra.mxu0 %v549
  %718 = vmatprep.subr.bf16.mxu0 0
  %719 = vmatpush1.bf16.msra.mxu0 %v550
  %720 = vmatprep.subr.bf16.mxu0 0
  %721 = vmatpush1.bf16.msra.mxu0 %v551
  %722 = vmatprep.subr.bf16.mxu0 0
  %723 = vmatpush1.bf16.msra.mxu0 %v552
  %724 = vmatprep.subr.bf16.mxu0 0
  %725 = vmatpush1.bf16.msra.mxu0 %v553
  %726 = vmatprep.subr.bf16.mxu0 0
  %727 = vmatpush1.bf16.msra.mxu0 %v554
  %728 = vmatprep.subr.bf16.mxu0 0
  %729 = vmatpush1.bf16.msra.mxu0 %v555
  %730 = vmatprep.subr.bf16.mxu0 0
  %731 = vmatpush1.bf16.msra.mxu0 %v556
  %732 = vmatprep.subr.bf16.mxu0 0
  %733 = vmatpush1.bf16.msra.mxu0 %v557
  %734 = vmatprep.mubr.bf16.mxu0 %v203
  %735 = vmatmul.mubr.bf16.gmra.mrb[0].mxu0 %v202
  %v736 = vpop.f32.mrb[0].mxu0
  %v737 = vadd.f32 %v185, %v736
  %v738 = vpop.f32.mrb[0].mxu0
  %v739 = vpop.f32.mrb[0].mxu0
  %v740 = vpop.f32.mrb[0].mxu0
  %741 = vdwg.mxu0
  %742 = vmatprep.subr.bf16.mxu0 0
  %743 = vmatpush1.bf16.msra.mxu0 %v558
  %744 = vmatprep.subr.bf16.mxu0 0
  %745 = vmatpush1.bf16.msra.mxu0 %v559
  %746 = vmatprep.subr.bf16.mxu0 0
  %747 = vmatpush1.bf16.msra.mxu0 %v560
  %748 = vmatprep.subr.bf16.mxu0 0
  %749 = vmatpush1.bf16.msra.mxu0 %v561
  %750 = vmatprep.subr.bf16.mxu0 0
  %751 = vmatpush1.bf16.msra.mxu0 %v562
  %752 = vmatprep.subr.bf16.mxu0 0
  %753 = vmatpush1.bf16.msra.mxu0 %v563
  %754 = vmatprep.subr.bf16.mxu0 0
  %755 = vmatpush1.bf16.msra.mxu0 %v564
  %756 = vmatprep.subr.bf16.mxu0 0
  %757 = vmatpush1.bf16.msra.mxu0 %v565
  %758 = vmatprep.subr.bf16.mxu0 0
  %759 = vmatpush1.bf16.msra.mxu0 %v566
  %760 = vmatprep.subr.bf16.mxu0 0
  %761 = vmatpush1.bf16.msra.mxu0 %v567
  %762 = vmatprep.subr.bf16.mxu0 0
  %763 = vmatpush1.bf16.msra.mxu0 %v568
  %764 = vmatprep.subr.bf16.mxu0 0
  %765 = vmatpush1.bf16.msra.mxu0 %v569
  %766 = vmatprep.subr.bf16.mxu0 0
  %767 = vmatpush1.bf16.msra.mxu0 %v570
  %768 = vmatprep.subr.bf16.mxu0 0
  %769 = vmatpush1.bf16.msra.mxu0 %v571
  %770 = vmatprep.subr.bf16.mxu0 0
  %771 = vmatpush1.bf16.msra.mxu0 %v572
  %772 = vmatprep.subr.bf16.mxu0 0
  %773 = vmatpush1.bf16.msra.mxu0 %v573
  %774 = vmatprep.mubr.bf16.mxu0 %v205
  %775 = vmatmul.mubr.bf16.gmra.mrb[0].mxu0 %v204
  %v776 = vpop.f32.mrb[0].mxu0
  %v777 = vadd.f32 %v737, %v776
  %v778 = vpop.f32.mrb[0].mxu0
  %v779 = vpop.f32.mrb[0].mxu0
  %v780 = vpop.f32.mrb[0].mxu0
  %781 = vdwg.mxu0
  %782 = vmatprep.subr.bf16.mxu0 0
  %783 = vmatpush1.bf16.msra.mxu0 %v574
  %784 = vmatprep.subr.bf16.mxu0 0
  %785 = vmatpush1.bf16.msra.mxu0 %v575
  %786 = vmatprep.subr.bf16.mxu0 0
  %787 = vmatpush1.bf16.msra.mxu0 %v576
  %788 = vmatprep.subr.bf16.mxu0 0
  %789 = vmatpush1.bf16.msra.mxu0 %v577
  %790 = vmatprep.subr.bf16.mxu0 0
  %791 = vmatpush1.bf16.msra.mxu0 %v578
  %792 = vmatprep.subr.bf16.mxu0 0
  %793 = vmatpush1.bf16.msra.mxu0 %v579
  %794 = vmatprep.subr.bf16.mxu0 0
  %795 = vmatpush1.bf16.msra.mxu0 %v580
  %796 = vmatprep.subr.bf16.mxu0 0
  %797 = vmatpush1.bf16.msra.mxu0 %v581
  %798 = vmatprep.subr.bf16.mxu0 0
  %799 = vmatpush1.bf16.msra.mxu0 %v582
  %800 = vmatprep.subr.bf16.mxu0 0
  %801 = vmatpush1.bf16.msra.mxu0 %v583
  %802 = vmatprep.subr.bf16.mxu0 0
  %803 = vmatpush1.bf16.msra.mxu0 %v584
  %804 = vmatprep.subr.bf16.mxu0 0
  %805 = vmatpush1.bf16.msra.mxu0 %v585
  %806 = vmatprep.subr.bf16.mxu0 0
  %807 = vmatpush1.bf16.msra.mxu0 %v586
  %808 = vmatprep.subr.bf16.mxu0 0
  %809 = vmatpush1.bf16.msra.mxu0 %v587
  %810 = vmatprep.subr.bf16.mxu0 0
  %811 = vmatpush1.bf16.msra.mxu0 %v588
  %812 = vmatprep.subr.bf16.mxu0 0
  %813 = vmatpush1.bf16.msra.mxu0 %v589
  %814 = vmatprep.mubr.bf16.mxu0 %v207
  %815 = vmatmul.mubr.bf16.gmra.mrb[0].mxu0 %v206
  %v816 = vpop.f32.mrb[0].mxu0
  %v817 = vadd.f32 %v777, %v816
  %v818 = vpop.f32.mrb[0].mxu0
  %v819 = vpop.f32.mrb[0].mxu0
  %v820 = vpop.f32.mrb[0].mxu0
  %821 = vdwg.mxu0
  %822 = vmatprep.subr.bf16.mxu0 0
  %823 = vmatpush1.bf16.msra.mxu0 %v590
  %824 = vmatprep.subr.bf16.mxu0 0
  %825 = vmatpush1.bf16.msra.mxu0 %v591
  %826 = vmatprep.subr.bf16.mxu0 0
  %827 = vmatpush1.bf16.msra.mxu0 %v592
  %828 = vmatprep.subr.bf16.mxu0 0
  %829 = vmatpush1.bf16.msra.mxu0 %v593
  %830 = vmatprep.subr.bf16.mxu0 0
  %831 = vmatpush1.bf16.msra.mxu0 %v594
  %832 = vmatprep.subr.bf16.mxu0 0
  %833 = vmatpush1.bf16.msra.mxu0 %v595
  %834 = vmatprep.subr.bf16.mxu0 0
  %835 = vmatpush1.bf16.msra.mxu0 %v596
  %836 = vmatprep.subr.bf16.mxu0 0
  %837 = vmatpush1.bf16.msra.mxu0 %v597
  %838 = vmatprep.subr.bf16.mxu0 0
  %839 = vmatpush1.bf16.msra.mxu0 %v598
  %840 = vmatprep.subr.bf16.mxu0 0
  %841 = vmatpush1.bf16.msra.mxu0 %v599
  %842 = vmatprep.subr.bf16.mxu0 0
  %843 = vmatpush1.bf16.msra.mxu0 %v600
  %844 = vmatprep.subr.bf16.mxu0 0
  %845 = vmatpush1.bf16.msra.mxu0 %v601
  %846 = vmatprep.subr.bf16.mxu0 0
  %847 = vmatpush1.bf16.msra.mxu0 %v602
  %848 = vmatprep.subr.bf16.mxu0 0
  %849 = vmatpush1.bf16.msra.mxu0 %v603
  %850 = vmatprep.subr.bf16.mxu0 0
  %851 = vmatpush1.bf16.msra.mxu0 %v604
  %852 = vmatprep.subr.bf16.mxu0 0
  %853 = vmatpush1.bf16.msra.mxu0 %v605
  %854 = vmatprep.mubr.bf16.mxu0 %v209
  %855 = vmatmul.mubr.bf16.gmra.mrb[0].mxu0 %v208
  %v856 = vpop.f32.mrb[0].mxu0
  %v857 = vadd.f32 %v817, %v856
  %v858 = vpop.f32.mrb[0].mxu0
  %v859 = vpop.f32.mrb[0].mxu0
  %v860 = vpop.f32.mrb[0].mxu0
  %861 = vdwg.mxu0
  %862 = vmatprep.subr.bf16.mxu0 0
  %863 = vmatpush1.bf16.msra.mxu0 %v606
  %864 = vmatprep.subr.bf16.mxu0 0
  %865 = vmatpush1.bf16.msra.mxu0 %v607
  %866 = vmatprep.subr.bf16.mxu0 0
  %867 = vmatpush1.bf16.msra.mxu0 %v608
  %868 = vmatprep.subr.bf16.mxu0 0
  %869 = vmatpush1.bf16.msra.mxu0 %v609
  %870 = vmatprep.subr.bf16.mxu0 0
  %871 = vmatpush1.bf16.msra.mxu0 %v610
  %872 = vmatprep.subr.bf16.mxu0 0
  %873 = vmatpush1.bf16.msra.mxu0 %v611
  %874 = vmatprep.subr.bf16.mxu0 0
  %875 = vmatpush1.bf16.msra.mxu0 %v612
  %876 = vmatprep.subr.bf16.mxu0 0
  %877 = vmatpush1.bf16.msra.mxu0 %v613
  %878 = vmatprep.subr.bf16.mxu0 0
  %879 = vmatpush1.bf16.msra.mxu0 %v614
  %880 = vmatprep.subr.bf16.mxu0 0
  %881 = vmatpush1.bf16.msra.mxu0 %v615
  %882 = vmatprep.subr.bf16.mxu0 0
  %883 = vmatpush1.bf16.msra.mxu0 %v616
  %884 = vmatprep.subr.bf16.mxu0 0
  %885 = vmatpush1.bf16.msra.mxu0 %v617
  %886 = vmatprep.subr.bf16.mxu0 0
  %887 = vmatpush1.bf16.msra.mxu0 %v618
  %888 = vmatprep.subr.bf16.mxu0 0
  %889 = vmatpush1.bf16.msra.mxu0 %v619
  %890 = vmatprep.subr.bf16.mxu0 0
  %891 = vmatpush1.bf16.msra.mxu0 %v620
  %892 = vmatprep.subr.bf16.mxu0 0
  %893 = vmatpush1.bf16.msra.mxu0 %v621
  %894 = vmatprep.mubr.bf16.mxu0 %v211
  %895 = vmatmul.mubr.bf16.gmra.mrb[0].mxu0 %v210
  %v896 = vpop.f32.mrb[0].mxu0
  %v897 = vadd.f32 %v857, %v896
  %v898 = vpop.f32.mrb[0].mxu0
  %v899 = vpop.f32.mrb[0].mxu0
  %v900 = vpop.f32.mrb[0].mxu0
  %901 = vdwg.mxu0
  %902 = vst [vmem:[%s3] sm:$0xff] %v897
  // Predicated region
  $region14: #{simple_model_forward.1} parent=0 // pred_check
    _
  $region15: #{simple_model_forward.1} parent=0 // pred_check_branch
    %904 = sbr.rel (0) target = $region17
  $region16: #{simple_model_forward.1} parent=0 // pred_region
    _
  $region17: #{simple_model_forward.1} parent=0 // pred_fallthru
    _
  // Predicated region
  $region18: #{simple_model_forward.1} parent=0 // pred_check
    _
  $region19: #{simple_model_forward.1} parent=0 // pred_check_branch
    %906 = sbr.rel (0) target = $region21
  $region20: #{simple_model_forward.1} parent=0 // pred_region
    _
  $region21: #{simple_model_forward.1} parent=0 // pred_fallthru
    _

</llo_original>
